<compile_context>
chip_gen: v6e
topology: v6e:2x2x1
jax: 0.10.0
libtpu: 0.0.40
codegen_flags: <defaults>
</compile_context>

<pallas_src>
import functools

import jax
import jax.numpy as jnp
from jax import lax
from jax.experimental import pallas as pl
from jax.experimental.pallas import tpu as pltpu

LANE = 128
SUB = 8
MAX_BLOCK_ROWS = 2048   # (2048,128) f32 block = 1 MiB; <= 6 MiB double-buffered VMEM


def _focal_elementwise(x, y, gamma, alpha):
    """Focal-modulated BCE-with-logits, elementwise, f32 in / f32 out."""
    # Numerically stable BCE-with-logits (reduction='none'):
    #   max(x, 0) - x*y + log1p(exp(-|x|))
    e = jnp.exp(-jnp.abs(x))                       # reused below for the sigmoid
    bce = jnp.maximum(x, 0.0) - x * y + jnp.log1p(e)
    r = 1.0 / (1.0 + e)
    p = jnp.where(x >= 0.0, r, e * r)              # sigmoid(x) without a 2nd exp
    p_t = y * p + (1.0 - y) * (1.0 - p)
    alpha_factor = y * alpha + (1.0 - y) * (1.0 - alpha)
    u = 1.0 - p_t                                  # in [0,1] for targets y in [0,1]
    g = float(gamma)
    if g == 0.0:
        mod = jnp.ones_like(u)
    elif g == 0.5:
        mod = jnp.sqrt(u)
    elif g == 1.0:
        mod = u
    elif g == 1.5:
        mod = u * jnp.sqrt(u)                      # (1-p_t)**1.5 without log/exp
    elif g == 2.0:
        mod = u * u
    else:
        mod = jnp.where(u > 0.0,
                        jnp.exp(g * jnp.log(jnp.maximum(u, 1e-30))), 0.0)
    return bce * alpha_factor * mod


def _focal_none_kernel(pred_ref, true_ref, out_ref, *, gamma, alpha):
    x = pred_ref[...].astype(jnp.float32)
    y = true_ref[...].astype(jnp.float32)
    out_ref[...] = _focal_elementwise(x, y, gamma, alpha).astype(out_ref.dtype)


def _focal_partial_kernel(pred_ref, true_ref, out_ref, *, gamma, alpha,
                          block_rows, full_rows, rem, need_mask):
    x = pred_ref[...].astype(jnp.float32)
    y = true_ref[...].astype(jnp.float32)
    loss = _focal_elementwise(x, y, gamma, alpha)
    if need_mask:
        # Mask out the padded / ragged tail (positions >= n) in-kernel; the
        # comparison is done on (row, lane) indices so no 32-bit overflow.
        i = pl.program_id(0)
        gr = i * block_rows + lax.broadcasted_iota(jnp.int32, loss.shape, 0)
        lc = lax.broadcasted_iota(jnp.int32, loss.shape, 1)
        valid = (gr < full_rows) | ((gr == full_rows) & (lc < rem))
        loss = jnp.where(valid, loss, 0.0)
    # vreg-shaped partial sum: (block_rows//8, 8, 128) summed over the leading
    # axis = pure VPU vreg adds; the cross-lane reduce happens once, in JAX.
    out_ref[...] = jnp.sum(loss.reshape(-1, SUB, LANE), axis=0, keepdims=True)


def _pad_and_reshape(a, rows, pad):
    a = a.reshape(-1)
    if pad:
        # Only hit when n is not a multiple of 8*128; adds < 1024 elements.
        # TODO(synk): for huge ragged inputs this jnp.pad is still a full copy;
        # a split main-body + tail call would avoid it.
        a = jnp.pad(a, (0, pad))
    return a.reshape(rows, LANE)


def focal_loss(pred, true, gamma=1.5, alpha=0.25, reduction="mean"):
    """Matches FocalLoss(nn.BCEWithLogitsLoss(reduction=reduction), gamma, alpha)."""
    if reduction not in ("mean", "sum", "none"):
        raise ValueError(f"unsupported reduction: {reduction!r}")

    orig_shape = pred.shape
    n = pred.size
    rows = pl.cdiv(pl.cdiv(n, LANE), SUB) * SUB        # rows padded to multiple of 8
    pad = rows * LANE - n

    x2 = _pad_and_reshape(pred, rows, pad)             # original dtype, no up-cast
    y2 = _pad_and_reshape(true, rows, pad)

    block_rows = min(MAX_BLOCK_ROWS, rows)
    num_blocks = pl.cdiv(rows, block_rows)             # last block may be ragged
    grid = (num_blocks,)
    in_specs = [pl.BlockSpec((block_rows, LANE), lambda i: (i, 0)),
                pl.BlockSpec((block_rows, LANE), lambda i: (i, 0))]
    cparams = pltpu.CompilerParams(dimension_semantics=("parallel",))

    if reduction == "none":
        out = pl.pallas_call(
            functools.partial(_focal_none_kernel, gamma=gamma, alpha=alpha),
            out_shape=jax.ShapeDtypeStruct((rows, LANE), pred.dtype),
            grid=grid,
            in_specs=in_specs,
            out_specs=pl.BlockSpec((block_rows, LANE), lambda i: (i, 0)),
            compiler_params=cparams,
        )(x2, y2)
        return out.reshape(-1)[:n].reshape(orig_shape)

    # mean / sum: per-block (8,128) partial sums, finished in JAX.
    need_mask = (num_blocks * block_rows * LANE) != n
    partials = pl.pallas_call(
        functools.partial(_focal_partial_kernel, gamma=gamma, alpha=alpha,
                          block_rows=block_rows, full_rows=n // LANE,
                          rem=n % LANE, need_mask=need_mask),
        out_shape=jax.ShapeDtypeStruct((num_blocks, SUB, LANE), jnp.float32),
        grid=grid,
        in_specs=in_specs,
        out_specs=pl.BlockSpec((1, SUB, LANE), lambda i: (i, 0, 0)),
        compiler_params=cparams,
    )(x2, y2)
    total = jnp.sum(partials)                          # tiny: num_blocks*1024 f32
    if reduction == "mean":
        total = total / n
    return total.astype(pred.dtype)


def _focal_loss_ref(pred, true, gamma=1.5, alpha=0.25, reduction="mean"):
    x = pred.astype(jnp.float32)
    y = true.astype(jnp.float32)
    bce = jnp.maximum(x, 0.0) - x * y + jnp.log1p(jnp.exp(-jnp.abs(x)))
    p = jax.nn.sigmoid(x)
    p_t = y * p + (1.0 - y) * (1.0 - p)
    alpha_factor = y * alpha + (1.0 - y) * (1.0 - alpha)
    loss = bce * alpha_factor * jnp.power(1.0 - p_t, gamma)
    if reduction == "mean":
        return loss.mean()
    if reduction == "sum":
        return loss.sum()
    return loss


if __name__ == "__main__":
    key = jax.random.PRNGKey(0)
    k1, k2, k3, k4 = jax.random.split(key, 4)

    # NCHW logits + binary targets (lane-aligned case: 2*4*16*16 = 2048 elems).
    pred = jax.random.normal(k1, (2, 4, 16, 16), dtype=jnp.float32) * 2.0
    true = (jax.random.uniform(k2, (2, 4, 16, 16)) > 0.5).astype(jnp.float32)

    out_mean = jax.block_until_ready(
        focal_loss(pred, true, gamma=1.5, alpha=0.25, reduction="mean"))
    ref_mean = _focal_loss_ref(pred, true, reduction="mean")
    assert jnp.allclose(out_mean, ref_mean, rtol=1e-5, atol=1e-6), (out_mean, ref_mean)

    out_sum = jax.block_until_ready(
        focal_loss(pred, true, gamma=1.5, alpha=0.25, reduction="sum"))
    ref_sum = _focal_loss_ref(pred, true, reduction="sum")
    assert jnp.allclose(out_sum, ref_sum, rtol=1e-5, atol=1e-4), (out_sum, ref_sum)

    out_none = jax.block_until_ready(
        focal_loss(pred, true, gamma=1.5, alpha=0.25, reduction="none"))
    ref_none = _focal_loss_ref(pred, true, reduction="none")
    assert out_none.shape == pred.shape
    assert jnp.allclose(out_none, ref_none, rtol=1e-5, atol=1e-6)

    # Non-lane-aligned shape exercises the in-kernel tail mask (no mask array).
    pred2 = jax.random.normal(k3, (3, 5, 7, 11), dtype=jnp.float32)
    true2 = (jax.random.uniform(k4, (3, 5, 7, 11)) > 0.5).astype(jnp.float32)
    out2 = jax.block_until_ready(focal_loss(pred2, true2, reduction="mean"))
    ref2 = _focal_loss_ref(pred2, true2, reduction="mean")
    assert jnp.allclose(out2, ref2, rtol=1e-5, atol=1e-6), (out2, ref2)

    print("KERNEL_OK")
</pallas_src>

<mosaic_0001>
module attributes {stable_mosaic.version = 11 : i64} {
  func.func @_focal_partial_kernel(%arg0: i32, %arg1: memref<16x128xf32, #tpu.memory_space<vmem>>, %arg2: memref<16x128xf32, #tpu.memory_space<vmem>>, %arg3: memref<1x8x128xf32, #tpu.memory_space<vmem>>) attributes {dimension_semantics = [#tpu.dimension_semantics<parallel>], iteration_bounds = array<i64: 1>, scalar_prefetch = 0 : i64, scratch_operands = 0 : i64, tpu.core_type = #tpu.core_type<tc>, window_params = [{transform_indices = @transform_0, window_bounds = array<i64: 16, 128>}, {transform_indices = @transform_1, window_bounds = array<i64: 16, 128>}, {transform_indices = @transform_2, window_bounds = array<i64: 1, 8, 128>}]} {
    %c0 = arith.constant 0 : index
    %c0_0 = arith.constant 0 : index
    %0 = vector.load %arg1[%c0, %c0_0] : memref<16x128xf32, #tpu.memory_space<vmem>>, vector<16x128xf32>
    %c0_1 = arith.constant 0 : index
    %c0_2 = arith.constant 0 : index
    %1 = vector.load %arg2[%c0_1, %c0_2] : memref<16x128xf32, #tpu.memory_space<vmem>>, vector<16x128xf32>
    %2 = math.absf %0 : vector<16x128xf32>
    %cst = arith.constant 0.000000e+00 : f32
    %3 = vector.broadcast %cst : f32 to vector<16x128xf32>
    %4 = arith.subf %3, %2 : vector<16x128xf32>
    %5 = math.exp %4 : vector<16x128xf32>
    %cst_3 = arith.constant 0.000000e+00 : f32
    %6 = vector.broadcast %cst_3 : f32 to vector<16x128xf32>
    %7 = arith.maximumf %0, %6 : vector<16x128xf32>
    %8 = arith.mulf %0, %1 : vector<16x128xf32>
    %9 = arith.subf %7, %8 : vector<16x128xf32>
    %10 = math.log1p %5 : vector<16x128xf32>
    %11 = arith.addf %9, %10 : vector<16x128xf32>
    %cst_4 = arith.constant 1.000000e+00 : f32
    %12 = vector.broadcast %cst_4 : f32 to vector<16x128xf32>
    %13 = arith.addf %12, %5 : vector<16x128xf32>
    %cst_5 = arith.constant 1.000000e+00 : f32
    %14 = vector.broadcast %cst_5 : f32 to vector<16x128xf32>
    %15 = arith.divf %14, %13 : vector<16x128xf32>
    %cst_6 = arith.constant 0.000000e+00 : f32
    %16 = vector.broadcast %cst_6 : f32 to vector<16x128xf32>
    %17 = arith.cmpf oge, %0, %16 : vector<16x128xf32>
    %18 = arith.mulf %5, %15 : vector<16x128xf32>
    %19 = arith.select %17, %15, %18 : vector<16x128xi1>, vector<16x128xf32>
    %20 = arith.mulf %1, %19 : vector<16x128xf32>
    %cst_7 = arith.constant 1.000000e+00 : f32
    %21 = vector.broadcast %cst_7 : f32 to vector<16x128xf32>
    %22 = arith.subf %21, %1 : vector<16x128xf32>
    %cst_8 = arith.constant 1.000000e+00 : f32
    %23 = vector.broadcast %cst_8 : f32 to vector<16x128xf32>
    %24 = arith.subf %23, %19 : vector<16x128xf32>
    %25 = arith.mulf %22, %24 : vector<16x128xf32>
    %26 = arith.addf %20, %25 : vector<16x128xf32>
    %cst_9 = arith.constant 2.500000e-01 : f32
    %27 = vector.broadcast %cst_9 : f32 to vector<16x128xf32>
    %28 = arith.mulf %1, %27 : vector<16x128xf32>
    %cst_10 = arith.constant 1.000000e+00 : f32
    %29 = vector.broadcast %cst_10 : f32 to vector<16x128xf32>
    %30 = arith.subf %29, %1 : vector<16x128xf32>
    %cst_11 = arith.constant 7.500000e-01 : f32
    %31 = vector.broadcast %cst_11 : f32 to vector<16x128xf32>
    %32 = arith.mulf %30, %31 : vector<16x128xf32>
    %33 = arith.addf %28, %32 : vector<16x128xf32>
    %cst_12 = arith.constant 1.000000e+00 : f32
    %34 = vector.broadcast %cst_12 : f32 to vector<16x128xf32>
    %35 = arith.subf %34, %26 : vector<16x128xf32>
    %36 = math.sqrt %35 : vector<16x128xf32>
    %37 = arith.mulf %35, %36 : vector<16x128xf32>
    %38 = arith.mulf %11, %33 : vector<16x128xf32>
    %39 = arith.mulf %38, %37 : vector<16x128xf32>
    %40 = vector.shape_cast %39 : vector<16x128xf32> to vector<2x8x128xf32>
    %cst_13 = arith.constant dense<0.000000e+00> : vector<8x128xf32>
    %41 = vector.multi_reduction <add>, %40, %cst_13 [0] : vector<2x8x128xf32> to vector<8x128xf32>
    %42 = vector.shape_cast %41 : vector<8x128xf32> to vector<1x8x128xf32>
    %c0_14 = arith.constant 0 : index
    %c0_15 = arith.constant 0 : index
    %c0_16 = arith.constant 0 : index
    %43 = vector.load %arg3[%c0_14, %c0_15, %c0_16] : memref<1x8x128xf32, #tpu.memory_space<vmem>>, vector<1x8x128xf32>
    tpu.vector_store %arg3[%c0_14, %c0_15, %c0_16], %42 {strides = array<i32>} : memref<1x8x128xf32, #tpu.memory_space<vmem>>, vector<1x8x128xf32>,
    return
  }
  func.func @transform_0(%arg0: i32) -> (i32, i32) {
    %c0_i32 = arith.constant 0 : i32
    %c0_i32_0 = arith.constant 0 : i32
    return %arg0, %c0_i32 : i32, i32
  }
  func.func @transform_1(%arg0: i32) -> (i32, i32) {
    %c0_i32 = arith.constant 0 : i32
    %c0_i32_0 = arith.constant 0 : i32
    return %arg0, %c0_i32 : i32, i32
  }
  func.func @transform_2(%arg0: i32) -> (i32, i32, i32) {
    %c0_i32 = arith.constant 0 : i32
    %c0_i32_0 = arith.constant 0 : i32
    %c0_i32_1 = arith.constant 0 : i32
    return %arg0, %c0_i32, %c0_i32_0 : i32, i32, i32
  }
}

</mosaic_0001>

<llo_original>
// kernel: tpu_custom_call.1
$region0: #{tpu_custom_call.1}
  #allocation0 [shape = 'u32[]', space=smem, size = 0x4, offset = 0x4, fixed_abs, tag = 'smem constant byte address 0x4 - core index']
  #allocation1 [shape = 'u32[144,128]{1,0:T(1,128)}', space=vmem, size = 0x12000, scoped, tag = 'internal scratch']
  %s0 = inlined_call_operand.hbm [shape: f32[16,128], index: 0, kind: input, shape index: {}]
  %s1 = inlined_call_operand.hbm [shape: f32[16,128], index: 1, kind: input, shape index: {}]
  %s2 = inlined_call_operand.hbm [shape: f32[1,8,128], index: 2, kind: output, shape index: {}]
  %s3 = sld [smem:[#allocation0]]
  $region26: #{tpu_custom_call.1} parent=0
    _
  %s5 = ssub.s32 1, %s3
  %s6 = scalar_select 0, %s5, %s3
  $region1: #{tpu_custom_call.1} parent=0
    #allocation2 [shape = 'u8[8192]{0}', space=vmem, size = 0x2000, scoped, tag = 'input window, operand 0, single buffered']
    #allocation3 [shape = 's32[1]{0}', space=sflag, size = 0x4, scoped, tag = 'scoped memory for tpu_custom_call.1']
    #allocation4 [shape = 's32[1]{0}', space=sflag, size = 0x4, scoped, tag = 'scoped memory for tpu_custom_call.1']
    #allocation5 [shape = 'u8[8192]{0}', space=vmem, size = 0x2000, scoped, tag = 'input window, operand 1, single buffered']
    #allocation6 [shape = 's32[1]{0}', space=sflag, size = 0x4, scoped, tag = 'scoped memory for tpu_custom_call.1']
    #allocation7 [shape = 'u8[4096]{0}', space=vmem, size = 0x1000, scoped, tag = 'output window, operand 0, single buffered']
    %7 = vsyncpa [#allocation3], 0
    %8 = vsyncpa [#allocation6], 0
    %9 = vsyncpa [#allocation4], 0
    // Predicated region
    $region2: #{tpu_custom_call.1} parent=1 // pred_check
      _
    $region3: #{tpu_custom_call.1} parent=1 // pred_check_branch
      %11 = sbr.rel (0) target = $region5
    $region4: #{tpu_custom_call.1} parent=1 // pred_region
      %s13 = ssub.s32 256, 256
      %14 = vsyncadd [#allocation3], %s13
      %s15 = sshll.u32 [#allocation2], 4
      %s16 = int_to_ptr.vmem [resolvable:$true] %s15
      %21 = dma.hbm_to_vmem [thread:$0]  %s0, 256, %s16, [#allocation3], 128, 128, 8
    $region5: #{tpu_custom_call.1} parent=1 // pred_fallthru
      _
    // Predicated region
    $region6: #{tpu_custom_call.1} parent=1 // pred_check
      _
    $region7: #{tpu_custom_call.1} parent=1 // pred_check_branch
      %23 = sbr.rel (0) target = $region9
    $region8: #{tpu_custom_call.1} parent=1 // pred_region
      %s25 = ssub.s32 256, 256
      %26 = vsyncadd [#allocation6], %s25
      %s27 = sshll.u32 [#allocation5], 4
      %s28 = int_to_ptr.vmem [resolvable:$true] %s27
      %33 = dma.hbm_to_vmem [thread:$0]  %s1, 256, %s28, [#allocation6], 128, 128, 8
    $region9: #{tpu_custom_call.1} parent=1 // pred_fallthru
      _
    // Predicated region
    $region10: #{tpu_custom_call.1} parent=1 // pred_check
      _
    $region11: #{tpu_custom_call.1} parent=1 // pred_check_branch
      %35 = sbr.rel (0) target = $region13
    $region12: #{tpu_custom_call.1} parent=1 // pred_region
      %36 = dma.done [#allocation3], 256
    $region13: #{tpu_custom_call.1} parent=1 // pred_fallthru
      _
    // Predicated region
    $region14: #{tpu_custom_call.1} parent=1 // pred_check
      _
    $region15: #{tpu_custom_call.1} parent=1 // pred_check_branch
      %38 = sbr.rel (0) target = $region17
    $region16: #{tpu_custom_call.1} parent=1 // pred_region
      %39 = dma.done [#allocation6], 256
    $region17: #{tpu_custom_call.1} parent=1 // pred_fallthru
      _
    %v40 = vld [vmem:[#allocation2] sm:$0xff]
    %v41 = vld [vmem:[#allocation2 + $0x8] sm:$0xff]
    %v42 = vld [vmem:[#allocation5] sm:$0xff]
    %v43 = vld [vmem:[#allocation5 + $0x8] sm:$0xff]
    %v44 = vand.u32 2147483647, %v40
    %v45 = vand.u32 2147483647, %v41
    %v46 = vsub.f32 0.0, %v44
    %v47 = vsub.f32 0.0, %v45
    %v48 = vmul.f32 %v46, 1.442695
    %v49 = vpow.pop %v48
    %v50 = vmul.f32 %v47, 1.442695
    %v51 = vpow.pop %v50
    %v52 = vmax.f32 %v40, 0.0
    %v53 = vmax.f32 %v41, 0.0
    %v54 = vmul.f32 %v40, %v42
    %v55 = vmul.f32 %v41, %v43
    %v56 = vsub.f32 %v52, %v54
    %v57 = vsub.f32 %v53, %v55
    %v58 = vadd.f32 %v49, 1.0
    %v59 = vlog2.pop %v58
    %v60 = vmul.f32 %v59, 0.6931472
    %v61 = vmul.f32 -0.5, %v49
    %v62 = vadd.f32 %v61, 1.0
    %v63 = vmul.f32 %v62, %v49
    %v64 = vand.u32 2147483647, %v49
    %vm65 = vcmp.lt.f32.partialorder %v64, 0.0004427343
    %v66 = vsel %vm65, %v63, %v60
    %v67 = vadd.f32 %v51, 1.0
    %v68 = vlog2.pop %v67
    %v69 = vmul.f32 %v68, 0.6931472
    %v70 = vmul.f32 -0.5, %v51
    %v71 = vadd.f32 %v70, 1.0
    %v72 = vmul.f32 %v71, %v51
    %v73 = vand.u32 2147483647, %v51
    %vm74 = vcmp.lt.f32.partialorder %v73, 0.0004427343
    %v75 = vsel %vm74, %v72, %v69
    %v76 = vadd.f32 %v56, %v66
    %v77 = vadd.f32 %v57, %v75
    %v78 = vadd.f32 %v49, 1.0
    %v79 = vadd.f32 %v51, 1.0
    %v80 = vrcp.pop %v78
    %v81 = vmul.f32 1.0, %v80
    %v82 = vrcp.pop %v79
    %v83 = vmul.f32 1.0, %v82
    %vm84 = vcmp.ge.f32.partialorder %v40, 0.0
    %vm85 = vcmp.ge.f32.partialorder %v41, 0.0
    %v86 = vmul.f32 %v49, %v81
    %v87 = vmul.f32 %v51, %v83
    %v88 = vsel %vm84, %v81, %v86
    %v89 = vsel %vm85, %v83, %v87
    %v90 = vmul.f32 %v42, %v88
    %v91 = vmul.f32 %v43, %v89
    %v92 = vsub.f32 1.0, %v42
    %v93 = vsub.f32 1.0, %v43
    %v94 = vsub.f32 1.0, %v88
    %v95 = vsub.f32 1.0, %v89
    %v96 = vmul.f32 %v92, %v94
    %v97 = vmul.f32 %v93, %v95
    %v98 = vadd.f32 %v90, %v96
    %v99 = vadd.f32 %v91, %v97
    %v100 = vmul.f32 %v42, 0.25
    %v101 = vmul.f32 %v43, 0.25
    %v102 = vmul.f32 %v92, 0.75
    %v103 = vmul.f32 %v93, 0.75
    %v104 = vadd.f32 %v100, %v102
    %v105 = vadd.f32 %v101, %v103
    %v106 = vsub.f32 1.0, %v98
    %v107 = vsub.f32 1.0, %v99
    %v108 = vrsqrt.pop %v106
    %v109 = vmul.f32 %v106, %v108
    %vm110 = vcmp.eq.f32.partialorder %v106, inf
    %v111 = vsel %vm110, %v106, %v109
    %vm112 = vcmp.eq.f32.partialorder %v106, 0.0
    %v113 = vand.u32 %v106, 2147483648
    %v114 = vsel %vm112, %v113, %v111
    %v115 = vrsqrt.pop %v107
    %v116 = vmul.f32 %v107, %v115
    %vm117 = vcmp.eq.f32.partialorder %v107, inf
    %v118 = vsel %vm117, %v107, %v116
    %vm119 = vcmp.eq.f32.partialorder %v107, 0.0
    %v120 = vand.u32 %v107, 2147483648
    %v121 = vsel %vm119, %v120, %v118
    %v122 = vmul.f32 %v106, %v114
    %v123 = vmul.f32 %v107, %v121
    %v124 = vmul.f32 %v76, %v104
    %v125 = vmul.f32 %v77, %v105
    %v126 = vmul.f32 %v124, %v122
    %v127 = vmul.f32 %v125, %v123
    %v128 = vadd.f32 %v126, %v127
    %129 = vst [vmem:[#allocation7] sm:$0xff] %v128
    // Predicated region
    $region18: #{tpu_custom_call.1} parent=1 // pred_check
      _
    $region19: #{tpu_custom_call.1} parent=1 // pred_check_branch
      %131 = sbr.rel (0) target = $region21
    $region20: #{tpu_custom_call.1} parent=1 // pred_region
      %s133 = ssub.s32 128, 128
      %134 = vsyncadd [#allocation4], %s133
      %s136 = sshll.u32 [#allocation7], 4
      %s137 = int_to_ptr.vmem [resolvable:$true] %s136
      %139 = dma.vmem_to_hbm [thread:$0]  %s137, 128, %s2, [#allocation4]
    $region21: #{tpu_custom_call.1} parent=1 // pred_fallthru
      _
    // Predicated region
    $region22: #{tpu_custom_call.1} parent=1 // pred_check
      _
    $region23: #{tpu_custom_call.1} parent=1 // pred_check_branch
      %141 = sbr.rel (0) target = $region25
    $region24: #{tpu_custom_call.1} parent=1 // pred_region
      %142 = dma.done [#allocation4], 128
    $region25: #{tpu_custom_call.1} parent=1 // pred_fallthru
      _
    %143 = vsyncpa [#allocation3], 1
    %144 = vsyncpa [#allocation6], 1
    %145 = vsyncpa [#allocation4], 1

</llo_original>
